<compile_context>
chip_gen: v6e
topology: v6e:2x2x1
jax: 0.10.0
libtpu: 0.0.40
codegen_flags: <defaults>
</compile_context>

<pallas_src>
import functools

import jax
import jax.numpy as jnp
from jax.experimental import pallas as pl
from jax.experimental.pallas import tpu as pltpu

WINDOW = 5
IN_DIM = 4 + WINDOW * WINDOW          # 29
HIDDEN = 128                          # per __init__ for window == 5
N_ACTIONS = 9
HEAD_PAD = 128                        # lane-dense fused-head / output width


def _round_up(n, m):
    return ((n + m - 1) // m) * m


def policy_kernel(x_ref, w1_ref, b1_ref, w23_ref, b23_ref, out_ref):
    """One batch tile: fc1+ReLU, fused (action|value) head, masked softmax."""
    # In-kernel cast to bf16 for the MXU (input stays f32 in HBM).
    x = x_ref[...].astype(jnp.bfloat16)                             # (TB, 29)

    # fc1 (bf16 MXU, f32 accumulate) + bias + ReLU, all elementwise in f32.
    h = jnp.dot(x, w1_ref[...], preferred_element_type=jnp.float32) + b1_ref[...]
    h = jnp.maximum(h, 0.0)                                         # (TB, 128) f32

    # Fused heads: one (128 -> 128) matmul. cols [0:9]=logits, [9]=value, rest 0.
    fused = (jnp.dot(h.astype(jnp.bfloat16), w23_ref[...],
                     preferred_element_type=jnp.float32)
             + b23_ref[...])                                        # (TB, 128) f32

    col = jax.lax.broadcasted_iota(jnp.int32, fused.shape, 1)
    is_action = col < N_ACTIONS

    # Numerically-stable softmax restricted to the 9 action columns.
    neg_big = jnp.float32(-1e30)
    logits = jnp.where(is_action, fused, neg_big)
    m = jnp.max(logits, axis=-1, keepdims=True)
    e = jnp.where(is_action, jnp.exp(logits - m), 0.0)
    inv = pl.reciprocal(jnp.sum(e, axis=-1, keepdims=True), approx=True)
    probs = e * inv                                                 # nonzero on cols [0:9]

    value_only = jnp.where(col == N_ACTIONS, fused, 0.0)            # col 9 = value

    # Single full-width (lane-dense) store: [probs | value | zeros].
    out_ref[...] = probs + value_only


def policy_forward(x, params, *, block_batch=2048):
    """Wrapper: fuse head params, pad batch, run batch-tiled pallas_call, slice."""
    w1, b1, w2, b2, w3, b3 = params
    batch = x.shape[0]

    # Fuse action_head (128,9) and value_head (128,1) into one lane-dense weight.
    w23 = jnp.zeros((HIDDEN, HEAD_PAD), jnp.float32)
    w23 = w23.at[:, :N_ACTIONS].set(w2)
    w23 = w23.at[:, N_ACTIONS:N_ACTIONS + 1].set(w3)
    b23 = jnp.zeros((1, HEAD_PAD), jnp.float32)
    b23 = b23.at[:, :N_ACTIONS].set(b2)
    b23 = b23.at[:, N_ACTIONS:N_ACTIONS + 1].set(b3)

    # Weight casts are tiny, one-shot; activations are cast inside the kernel.
    w1_bf = w1.astype(jnp.bfloat16)
    w23_bf = w23.astype(jnp.bfloat16)
    x_f32 = x.astype(jnp.float32)

    # Batch tile: sublane-friendly (multiple of 16), VMEM-sized.
    tb = min(block_batch, _round_up(batch, 16))
    padded = _round_up(batch, tb)
    if padded != batch:
        x_f32 = jnp.pad(x_f32, ((0, padded - batch), (0, 0)))
    n_blocks = padded // tb

    out = pl.pallas_call(
        policy_kernel,
        out_shape=jax.ShapeDtypeStruct((padded, HEAD_PAD), jnp.float32),
        grid=(n_blocks,),
        in_specs=[
            pl.BlockSpec((tb, IN_DIM), lambda i: (i, 0)),            # x (batch-tiled)
            pl.BlockSpec((IN_DIM, HIDDEN), lambda i: (0, 0)),        # w1 (resident)
            pl.BlockSpec((1, HIDDEN), lambda i: (0, 0)),             # b1 (resident)
            pl.BlockSpec((HIDDEN, HEAD_PAD), lambda i: (0, 0)),      # fused head W
            pl.BlockSpec((1, HEAD_PAD), lambda i: (0, 0)),           # fused head b
        ],
        out_specs=pl.BlockSpec((tb, HEAD_PAD), lambda i: (i, 0)),    # lane-dense out
        compiler_params=pltpu.CompilerParams(
            dimension_semantics=("parallel",),                        # v7x: 2 TCs
            vmem_limit_bytes=32 * 1024 * 1024,                        # safe on v5e/v6e/v7x
        ),
    )(x_f32, w1_bf, b1, w23_bf, b23)

    probs = out[:batch, :N_ACTIONS]
    values = out[:batch, N_ACTIONS:N_ACTIONS + 1]
    return probs, values


def init_params(key):
    """Deterministic init mimicking torch.nn.Linear default (U[-1/sqrt(fan_in), ...])."""
    k1, k2, k3, k4, k5, k6 = jax.random.split(key, 6)

    def uniform(k, shape, fan_in):
        bound = 1.0 / jnp.sqrt(jnp.float32(fan_in))
        return jax.random.uniform(k, shape, jnp.float32, -bound, bound)

    w1 = uniform(k1, (IN_DIM, HIDDEN), IN_DIM)          # fc1 weight, stored (in, out)
    b1 = uniform(k2, (1, HIDDEN), IN_DIM)               # fc1 bias (kept 2D for TPU)
    w2 = uniform(k3, (HIDDEN, N_ACTIONS), HIDDEN)       # action_head weight
    b2 = uniform(k4, (1, N_ACTIONS), HIDDEN)            # action_head bias
    w3 = uniform(k5, (HIDDEN, 1), HIDDEN)               # value_head weight
    b3 = uniform(k6, (1, 1), HIDDEN)                    # value_head bias
    return (w1, b1, w2, b2, w3, b3)


def policy_ref(x, params):
    """Plain-JAX f32 reference of the PyTorch forward for sanity checking."""
    w1, b1, w2, b2, w3, b3 = params
    h = jnp.maximum(x @ w1 + b1, 0.0)
    logits = h @ w2 + b2
    probs = jax.nn.softmax(logits, axis=-1)
    values = h @ w3 + b3
    return probs, values


if __name__ == "__main__":
    key = jax.random.PRNGKey(0)
    kx, kp = jax.random.split(key)

    batch = 2
    x = jax.random.normal(kx, (batch, IN_DIM), dtype=jnp.float32)
    params = init_params(kp)

    fwd = jax.jit(functools.partial(policy_forward))
    probs, values = fwd(x, params)
    jax.block_until_ready((probs, values))

    probs_ref, values_ref = policy_ref(x, params)
    assert probs.shape == (batch, N_ACTIONS)
    assert values.shape == (batch, 1)
    # bf16 MXU operands + approx reciprocal -> compare to f32 reference with
    # correspondingly looser tolerances.
    assert jnp.allclose(probs, probs_ref, atol=1e-2, rtol=1e-2)
    assert jnp.allclose(values, values_ref, atol=1e-2, rtol=1e-2)
    # softmax rows must sum to ~1 (approx reciprocal leaves ~1e-3 slack)
    assert jnp.allclose(jnp.sum(probs, axis=-1), 1.0, atol=5e-3)

    print("KERNEL_OK")
</pallas_src>

<mosaic_0001>
module attributes {stable_mosaic.version = 11 : i64} {
  func.func @policy_kernel(%arg0: i32, %arg1: memref<16x29xf32, #tpu.memory_space<vmem>>, %arg2: memref<29x128xbf16, #tpu.memory_space<vmem>>, %arg3: memref<1x128xf32, #tpu.memory_space<vmem>>, %arg4: memref<128x128xbf16, #tpu.memory_space<vmem>>, %arg5: memref<1x128xf32, #tpu.memory_space<vmem>>, %arg6: memref<16x128xf32, #tpu.memory_space<vmem>>) attributes {dimension_semantics = [#tpu.dimension_semantics<parallel>], iteration_bounds = array<i64: 1>, scalar_prefetch = 0 : i64, scratch_operands = 0 : i64, tpu.core_type = #tpu.core_type<tc>, window_params = [{transform_indices = @transform_0, window_bounds = array<i64: 16, 29>}, {pipeline_mode = #tpu.pipeline_mode<synchronous>, transform_indices = @transform_1, window_bounds = array<i64: 29, 128>}, {pipeline_mode = #tpu.pipeline_mode<synchronous>, transform_indices = @transform_2, window_bounds = array<i64: 1, 128>}, {pipeline_mode = #tpu.pipeline_mode<synchronous>, transform_indices = @transform_3, window_bounds = array<i64: 128, 128>}, {pipeline_mode = #tpu.pipeline_mode<synchronous>, transform_indices = @transform_4, window_bounds = array<i64: 1, 128>}, {transform_indices = @transform_5, window_bounds = array<i64: 16, 128>}]} {
    %c0 = arith.constant 0 : index
    %c0_0 = arith.constant 0 : index
    %0 = vector.load %arg1[%c0, %c0_0] : memref<16x29xf32, #tpu.memory_space<vmem>>, vector<16x29xf32>
    %1 = arith.truncf %0 : vector<16x29xf32> to vector<16x29xbf16>
    %c0_1 = arith.constant 0 : index
    %c0_2 = arith.constant 0 : index
    %2 = vector.load %arg2[%c0_1, %c0_2] : memref<29x128xbf16, #tpu.memory_space<vmem>>, vector<29x128xbf16>
    %cst = arith.constant dense<0.000000e+00> : vector<16x128xf32>
    %3 = tpu.matmul %1, %2, %cst {dimension_numbers = #tpu.dot_dimension_numbers<[1], [0], [0], [1], [0, 0, 1, 1], [], []>} : vector<16x29xbf16>, vector<29x128xbf16>, vector<16x128xf32> -> vector<16x128xf32>
    %c0_3 = arith.constant 0 : index
    %c0_4 = arith.constant 0 : index
    %4 = vector.load %arg3[%c0_3, %c0_4] : memref<1x128xf32, #tpu.memory_space<vmem>>, vector<1x128xf32>
    %5 = vector.broadcast %4 : vector<1x128xf32> to vector<16x128xf32>
    %6 = arith.addf %3, %5 : vector<16x128xf32>
    %cst_5 = arith.constant 0.000000e+00 : f32
    %7 = vector.broadcast %cst_5 : f32 to vector<16x128xf32>
    %8 = arith.maximumf %6, %7 : vector<16x128xf32>
    %9 = arith.truncf %8 : vector<16x128xf32> to vector<16x128xbf16>
    %c0_6 = arith.constant 0 : index
    %c0_7 = arith.constant 0 : index
    %10 = vector.load %arg4[%c0_6, %c0_7] : memref<128x128xbf16, #tpu.memory_space<vmem>>, vector<128x128xbf16>
    %cst_8 = arith.constant dense<0.000000e+00> : vector<16x128xf32>
    %11 = tpu.matmul %9, %10, %cst_8 {dimension_numbers = #tpu.dot_dimension_numbers<[1], [0], [0], [1], [0, 0, 1, 1], [], []>} : vector<16x128xbf16>, vector<128x128xbf16>, vector<16x128xf32> -> vector<16x128xf32>
    %c0_9 = arith.constant 0 : index
    %c0_10 = arith.constant 0 : index
    %12 = vector.load %arg5[%c0_9, %c0_10] : memref<1x128xf32, #tpu.memory_space<vmem>>, vector<1x128xf32>
    %13 = vector.broadcast %12 : vector<1x128xf32> to vector<16x128xf32>
    %14 = arith.addf %11, %13 : vector<16x128xf32>
    %15 = tpu.iota {dimensions = array<i32: 1>} : vector<16x128xi32>
    %c9_i32 = arith.constant 9 : i32
    %16 = vector.broadcast %c9_i32 : i32 to vector<16x128xi32>
    %17 = arith.cmpi slt, %15, %16 : vector<16x128xi32>
    %cst_11 = arith.constant -1.000000e+30 : f32
    %18 = vector.broadcast %cst_11 : f32 to vector<16x128xf32>
    %19 = arith.select %17, %14, %18 : vector<16x128xi1>, vector<16x128xf32>
    %cst_12 = arith.constant dense<0xFF800000> : vector<16xf32>
    %20 = vector.multi_reduction <maximumf>, %19, %cst_12 [1] : vector<16x128xf32> to vector<16xf32>
    %21 = vector.shape_cast %20 : vector<16xf32> to vector<16x1xf32>
    %22 = vector.broadcast %21 : vector<16x1xf32> to vector<16x128xf32>
    %23 = arith.subf %19, %22 : vector<16x128xf32>
    %24 = math.exp %23 : vector<16x128xf32>
    %cst_13 = arith.constant 0.000000e+00 : f32
    %25 = vector.broadcast %cst_13 : f32 to vector<16x128xf32>
    %26 = arith.select %17, %24, %25 : vector<16x128xi1>, vector<16x128xf32>
    %cst_14 = arith.constant dense<0.000000e+00> : vector<16xf32>
    %27 = vector.multi_reduction <add>, %26, %cst_14 [1] : vector<16x128xf32> to vector<16xf32>
    %28 = vector.shape_cast %27 : vector<16xf32> to vector<16x1xf32>
    %29 = tpu.reciprocal %28 {approx = true} : vector<16x1xf32> -> vector<16x1xf32>
    %30 = vector.broadcast %29 : vector<16x1xf32> to vector<16x128xf32>
    %31 = arith.mulf %26, %30 : vector<16x128xf32>
    %c9_i32_15 = arith.constant 9 : i32
    %32 = vector.broadcast %c9_i32_15 : i32 to vector<16x128xi32>
    %33 = arith.cmpi eq, %15, %32 : vector<16x128xi32>
    %cst_16 = arith.constant 0.000000e+00 : f32
    %34 = vector.broadcast %cst_16 : f32 to vector<16x128xf32>
    %35 = arith.select %33, %14, %34 : vector<16x128xi1>, vector<16x128xf32>
    %36 = arith.addf %31, %35 : vector<16x128xf32>
    %c0_17 = arith.constant 0 : index
    %c0_18 = arith.constant 0 : index
    %37 = vector.load %arg6[%c0_17, %c0_18] : memref<16x128xf32, #tpu.memory_space<vmem>>, vector<16x128xf32>
    tpu.vector_store %arg6[%c0_17, %c0_18], %36 {strides = array<i32>} : memref<16x128xf32, #tpu.memory_space<vmem>>, vector<16x128xf32>,
    return
  }
  func.func @transform_0(%arg0: i32) -> (i32, i32) {
    %c0_i32 = arith.constant 0 : i32
    %c0_i32_0 = arith.constant 0 : i32
    return %arg0, %c0_i32 : i32, i32
  }
  func.func @transform_1(%arg0: i32) -> (i32, i32) {
    %c0_i32 = arith.constant 0 : i32
    %c0_i32_0 = arith.constant 0 : i32
    %c0_i32_1 = arith.constant 0 : i32
    return %c0_i32, %c0_i32_0 : i32, i32
  }
  func.func @transform_2(%arg0: i32) -> (i32, i32) {
    %c0_i32 = arith.constant 0 : i32
    %c0_i32_0 = arith.constant 0 : i32
    %c0_i32_1 = arith.constant 0 : i32
    return %c0_i32, %c0_i32_0 : i32, i32
  }
  func.func @transform_3(%arg0: i32) -> (i32, i32) {
    %c0_i32 = arith.constant 0 : i32
    %c0_i32_0 = arith.constant 0 : i32
    %c0_i32_1 = arith.constant 0 : i32
    return %c0_i32, %c0_i32_0 : i32, i32
  }
  func.func @transform_4(%arg0: i32) -> (i32, i32) {
    %c0_i32 = arith.constant 0 : i32
    %c0_i32_0 = arith.constant 0 : i32
    %c0_i32_1 = arith.constant 0 : i32
    return %c0_i32, %c0_i32_0 : i32, i32
  }
  func.func @transform_5(%arg0: i32) -> (i32, i32) {
    %c0_i32 = arith.constant 0 : i32
    %c0_i32_0 = arith.constant 0 : i32
    return %arg0, %c0_i32 : i32, i32
  }
}

</mosaic_0001>

<llo_original>
// kernel: policy_forward.1
$region0: #{policy_forward.1}
  #allocation0 [shape = 'u32[]', space=smem, size = 0x4, offset = 0x4, fixed_abs, tag = 'smem constant byte address 0x4 - core index']
  #allocation1 [shape = 'u32[144,128]{1,0:T(1,128)}', space=vmem, size = 0x12000, scoped, tag = 'internal scratch']
  %s0 = inlined_call_operand.vmem [shape: f32[16,29], index: 0, kind: input, shape index: {}]
  %s1 = inlined_call_operand.vmem [shape: bf16[29,128], index: 1, kind: input, shape index: {}]
  %s2 = inlined_call_operand.vmem [shape: f32[1,128], index: 2, kind: input, shape index: {}]
  %s3 = inlined_call_operand.vmem [shape: bf16[128,128], index: 3, kind: input, shape index: {}]
  %s4 = inlined_call_operand.vmem [shape: f32[1,128], index: 4, kind: input, shape index: {}]
  %s5 = inlined_call_operand.vmem [shape: f32[16,128], index: 5, kind: output, shape index: {}]
  %s6 = sld [smem:[#allocation0]]
  $region30: #{policy_forward.1} parent=0
    _
  %s8 = ssub.s32 1, %s6
  %s9 = scalar_select 0, %s8, %s6
  // Predicated region
  $region2: #{policy_forward.1} parent=0 // pred_check
    _
  $region3: #{policy_forward.1} parent=0 // pred_check_branch
    %11 = sbr.rel (0) target = $region5
  $region4: #{policy_forward.1} parent=0 // pred_region
    _
  $region5: #{policy_forward.1} parent=0 // pred_fallthru
    _
  // Predicated region
  $region6: #{policy_forward.1} parent=0 // pred_check
    _
  $region7: #{policy_forward.1} parent=0 // pred_check_branch
    %13 = sbr.rel (0) target = $region9
  $region8: #{policy_forward.1} parent=0 // pred_region
    _
  $region9: #{policy_forward.1} parent=0 // pred_fallthru
    _
  // Predicated region
  $region10: #{policy_forward.1} parent=0 // pred_check
    _
  $region11: #{policy_forward.1} parent=0 // pred_check_branch
    %15 = sbr.rel (0) target = $region13
  $region12: #{policy_forward.1} parent=0 // pred_region
    _
  $region13: #{policy_forward.1} parent=0 // pred_fallthru
    _
  // Predicated region
  $region14: #{policy_forward.1} parent=0 // pred_check
    _
  $region15: #{policy_forward.1} parent=0 // pred_check_branch
    %17 = sbr.rel (0) target = $region17
  $region16: #{policy_forward.1} parent=0 // pred_region
    _
  $region17: #{policy_forward.1} parent=0 // pred_fallthru
    _
  // Predicated region
  $region18: #{policy_forward.1} parent=0 // pred_check
    _
  $region19: #{policy_forward.1} parent=0 // pred_check_branch
    %19 = sbr.rel (0) target = $region21
  $region20: #{policy_forward.1} parent=0 // pred_region
    _
  $region21: #{policy_forward.1} parent=0 // pred_fallthru
    _
  %v21 = vld [vmem:[%s0] sm:$0xff]
  %v22 = vld [vmem:[%s0 + $0x8] sm:$0xff]
  %v23 = vpack.c.bf16 %v22, %v21
  %v24 = vld [vmem:[%s1] sm:$0xf]
  %v25 = vld [vmem:[%s1 + $0x4] sm:$0xf]
  %v26 = vld [vmem:[%s1 + $0x8] sm:$0xf]
  %v27 = vld [vmem:[%s1 + $0xc] sm:$0x7]
  %v28 = vld [vmem:[%s2] sm:$0x1]
  %v30 = vlaneseq
  %v31 = vshrl.u32 %v30, 7
  %v32 = vsub.s32 0, %v31
  %v33 = vrot.slane %v28, %v32
  %v39 = vunpack.c.l.b16 %v24
  %v40 = vunpack.c.l.b16 %v25
  %v41 = vunpack.c.l.b16 %v26
  %v42 = vunpack.c.l.b16 %v27
  %v43 = vpack.c.b16 %v40, %v39
  %v44 = vpack.c.b16 %v42, %v41
  %vm46 = vcmask 236544
  %v48 = vsel %vm46, %v23, 0
  %vm50 = vcmask 1045504
  %vm51 = vcmask 1046528
  %v52 = vsel %vm50, 4294967295, 65535
  %v53 = vsel %vm51, %v52, 0
  %v55 = vand.u32 %v44, %v53
  %57 = vmatprep.subr.bf16.mxu0 0
  %58 = vmatpush1.bf16.msra.mxu0 0
  %59 = vmatprep.subr.bf16.mxu0 0
  %60 = vmatpush1.bf16.msra.mxu0 0
  %61 = vmatprep.subr.bf16.mxu0 0
  %62 = vmatpush1.bf16.msra.mxu0 0
  %63 = vmatprep.subr.bf16.mxu0 0
  %64 = vmatpush1.bf16.msra.mxu0 0
  %65 = vmatprep.subr.bf16.mxu0 0
  %66 = vmatpush1.bf16.msra.mxu0 0
  %67 = vmatprep.subr.bf16.mxu0 0
  %68 = vmatpush1.bf16.msra.mxu0 0
  %69 = vmatprep.subr.bf16.mxu0 0
  %70 = vmatpush1.bf16.msra.mxu0 %v55
  %71 = vmatprep.subr.bf16.mxu0 0
  %72 = vmatpush1.bf16.msra.mxu0 %v43
  %73 = vmatprep.subr.bf16.mxu0 0
  %74 = vmatpush2.bf16.msra.mxu0 0
  %75 = vmatprep.subr.bf16.mxu0 0
  %76 = vmatpush2.bf16.msra.mxu0 0
  %77 = vmatprep.subr.bf16.mxu0 0
  %78 = vmatpush2.bf16.msra.mxu0 0
  %79 = vmatprep.subr.bf16.mxu0 0
  %80 = vmatpush2.bf16.msra.mxu0 0
  %81 = vmatprep.subr.bf16.mxu0 0
  %82 = vmatpush2.bf16.msra.mxu0 0
  %83 = vmatprep.subr.bf16.mxu0 0
  %84 = vmatpush2.bf16.msra.mxu0 0
  %85 = vmatprep.subr.bf16.mxu0 0
  %86 = vmatpush2.bf16.msra.mxu0 0
  %87 = vmatprep.subr.bf16.mxu0 0
  %88 = vmatpush2.bf16.msra.mxu0 0
  %89 = vmatprep.mubr.bf16.mxu0 0
  %90 = vmatmul.mubr.bf16.gmra.mxu0 %v48
  %v91 = vpop.f32.mrf.mxu0
  %v92 = vadd.f32 %v33, %v91
  %v93 = vpop.f32.mrf.mxu0
  %v94 = vpop.f32.mrf.mxu0
  %v95 = vadd.f32 %v33, %v94
  %v96 = vpop.f32.mrf.mxu0
  %97 = vdwg.mxu0
  %v98 = vmax.f32 %v92, 0.0
  %v99 = vmax.f32 %v95, 0.0
  %v100 = vpack.c.bf16 %v99, %v98
  %v101 = vld [vmem:[%s3] sm:$0xf]
  %v102 = vld [vmem:[%s3 + $0x4] sm:$0xf]
  %v103 = vld [vmem:[%s3 + $0x8] sm:$0xf]
  %v104 = vld [vmem:[%s3 + $0xc] sm:$0xf]
  %v105 = vld [vmem:[%s3 + $0x10] sm:$0xf]
  %v106 = vld [vmem:[%s3 + $0x14] sm:$0xf]
  %v107 = vld [vmem:[%s3 + $0x18] sm:$0xf]
  %v108 = vld [vmem:[%s3 + $0x1c] sm:$0xf]
  %v109 = vld [vmem:[%s3 + $0x20] sm:$0xf]
  %v110 = vld [vmem:[%s3 + $0x24] sm:$0xf]
  %v111 = vld [vmem:[%s3 + $0x28] sm:$0xf]
  %v112 = vld [vmem:[%s3 + $0x2c] sm:$0xf]
  %v113 = vld [vmem:[%s3 + $0x30] sm:$0xf]
  %v114 = vld [vmem:[%s3 + $0x34] sm:$0xf]
  %v115 = vld [vmem:[%s3 + $0x38] sm:$0xf]
  %v116 = vld [vmem:[%s3 + $0x3c] sm:$0xf]
  %v117 = vld [vmem:[%s4] sm:$0x1]
  %v119 = vlaneseq
  %v120 = vshrl.u32 %v119, 7
  %v121 = vsub.s32 0, %v120
  %v122 = vrot.slane %v117, %v121
  %v140 = vunpack.c.l.b16 %v101
  %v141 = vunpack.c.l.b16 %v102
  %v142 = vunpack.c.l.b16 %v103
  %v143 = vunpack.c.l.b16 %v104
  %v144 = vunpack.c.l.b16 %v105
  %v145 = vunpack.c.l.b16 %v106
  %v146 = vunpack.c.l.b16 %v107
  %v147 = vunpack.c.l.b16 %v108
  %v148 = vunpack.c.l.b16 %v109
  %v149 = vunpack.c.l.b16 %v110
  %v150 = vunpack.c.l.b16 %v111
  %v151 = vunpack.c.l.b16 %v112
  %v152 = vunpack.c.l.b16 %v113
  %v153 = vunpack.c.l.b16 %v114
  %v154 = vunpack.c.l.b16 %v115
  %v155 = vunpack.c.l.b16 %v116
  %v156 = vpack.c.b16 %v141, %v140
  %v157 = vpack.c.b16 %v143, %v142
  %v158 = vpack.c.b16 %v145, %v144
  %v159 = vpack.c.b16 %v147, %v146
  %v160 = vpack.c.b16 %v149, %v148
  %v161 = vpack.c.b16 %v151, %v150
  %v162 = vpack.c.b16 %v153, %v152
  %v163 = vpack.c.b16 %v155, %v154
  %172 = vmatprep.subr.bf16.mxu0 0
  %173 = vmatpush1.bf16.msra.mxu0 %v163
  %174 = vmatprep.subr.bf16.mxu0 0
  %175 = vmatpush1.bf16.msra.mxu0 %v162
  %176 = vmatprep.subr.bf16.mxu0 0
  %177 = vmatpush1.bf16.msra.mxu0 %v161
  %178 = vmatprep.subr.bf16.mxu0 0
  %179 = vmatpush1.bf16.msra.mxu0 %v160
  %180 = vmatprep.subr.bf16.mxu0 0
  %181 = vmatpush1.bf16.msra.mxu0 %v159
  %182 = vmatprep.subr.bf16.mxu0 0
  %183 = vmatpush1.bf16.msra.mxu0 %v158
  %184 = vmatprep.subr.bf16.mxu0 0
  %185 = vmatpush1.bf16.msra.mxu0 %v157
  %186 = vmatprep.subr.bf16.mxu0 0
  %187 = vmatpush1.bf16.msra.mxu0 %v156
  %188 = vmatprep.subr.bf16.mxu0 0
  %189 = vmatpush2.bf16.msra.mxu0 0
  %190 = vmatprep.subr.bf16.mxu0 0
  %191 = vmatpush2.bf16.msra.mxu0 0
  %192 = vmatprep.subr.bf16.mxu0 0
  %193 = vmatpush2.bf16.msra.mxu0 0
  %194 = vmatprep.subr.bf16.mxu0 0
  %195 = vmatpush2.bf16.msra.mxu0 0
  %196 = vmatprep.subr.bf16.mxu0 0
  %197 = vmatpush2.bf16.msra.mxu0 0
  %198 = vmatprep.subr.bf16.mxu0 0
  %199 = vmatpush2.bf16.msra.mxu0 0
  %200 = vmatprep.subr.bf16.mxu0 0
  %201 = vmatpush2.bf16.msra.mxu0 0
  %202 = vmatprep.subr.bf16.mxu0 0
  %203 = vmatpush2.bf16.msra.mxu0 0
  %204 = vmatprep.mubr.bf16.mxu0 0
  %205 = vmatmul.mubr.bf16.gmra.mxu0 %v100
  %v206 = vpop.f32.mrf.mxu0
  %v207 = vadd.f32 %v122, %v206
  %v208 = vpop.f32.mrf.mxu0
  %v209 = vpop.f32.mrf.mxu0
  %v210 = vadd.f32 %v122, %v209
  %v211 = vpop.f32.mrf.mxu0
  %212 = vdwg.mxu0
  %v213 = vlaneseq
  %v214 = vand.u32 %v213, 127
  %vm215 = vcmp.lt.s32.totalorder %v214, 9
  %v216 = vsel %vm215, %v207, -1e+30
  %v217 = vsel %vm215, %v210, -1e+30
  %218 = vmax.xlane.f32.xlu0 %v216
  %v219 = vpop.xlane.xlu0 %218
  %220 = vmax.xlane.f32.xlu0 %v217
  %v221 = vpop.xlane.xlu0 %220
  %v222 = vsub.f32 %v216, %v219
  %v223 = vsub.f32 %v217, %v221
  %v224 = vmul.f32 %v222, 1.442695
  %v225 = vpow.pop %v224
  %v226 = vmul.f32 %v223, 1.442695
  %v227 = vpow.pop %v226
  %v228 = vsel %vm215, %v225, 0.0
  %v229 = vsel %vm215, %v227, 0.0
  %230 = vadd.xlane.f32.xlu0 %v228
  %v231 = vpop.xlane.xlu0 %230
  %232 = vadd.xlane.f32.xlu0 %v229
  %v233 = vpop.xlane.xlu0 %232
  %v234 = vrcp.pop %v231
  %v235 = vrcp.pop %v233
  %v236 = vmul.f32 %v228, %v234
  %v237 = vmul.f32 %v229, %v235
  %vm238 = vcmp.eq.s32.totalorder %v214, 9
  %v239 = vsel %vm238, %v207, 0.0
  %v240 = vsel %vm238, %v210, 0.0
  %v241 = vadd.f32 %v236, %v239
  %v242 = vadd.f32 %v237, %v240
  %243 = vst [vmem:[%s5] sm:$0xff] %v241
  %244 = vst [vmem:[%s5 + $0x8] sm:$0xff] %v242
  // Predicated region
  $region22: #{policy_forward.1} parent=0 // pred_check
    _
  $region23: #{policy_forward.1} parent=0 // pred_check_branch
    %246 = sbr.rel (0) target = $region25
  $region24: #{policy_forward.1} parent=0 // pred_region
    _
  $region25: #{policy_forward.1} parent=0 // pred_fallthru
    _
  // Predicated region
  $region26: #{policy_forward.1} parent=0 // pred_check
    _
  $region27: #{policy_forward.1} parent=0 // pred_check_branch
    %248 = sbr.rel (0) target = $region29
  $region28: #{policy_forward.1} parent=0 // pred_region
    _
  $region29: #{policy_forward.1} parent=0 // pred_fallthru
    _

</llo_original>
